<compile_context>
chip_gen: v7x
topology: tpu7x:2x2x1
jax: 0.10.0
libtpu: 0.0.40
codegen_flags: <defaults>
</compile_context>

<pallas_src>
import functools
from typing import NamedTuple, Optional

import jax
import jax.numpy as jnp
from jax.experimental import pallas as pl
from jax.experimental.pallas import tpu as pltpu


# ---------------------------------------------------------------------------
# Generation-aware VMEM budget
# ---------------------------------------------------------------------------
@functools.lru_cache(maxsize=1)
def _vmem_limit_bytes():
    """~75% of physical per-core VMEM (v5e/v6e: 128 MiB -> 96, v7x: 64 -> 48)."""
    phys = 64 * 1024 * 1024  # conservative fallback (v7x per-core)
    try:
        info = pltpu.get_tpu_info()
        cap = int(info.vmem_capacity_bytes)
        if cap >= 16 * 1024 * 1024:
            phys = cap
    except Exception:
        pass
    return (phys // 4) * 3


# ---------------------------------------------------------------------------
# Pre-tiled weight container (built once; weights stored contiguous per tile)
# ---------------------------------------------------------------------------
class PackedWab(NamedTuple):
    tiles: jax.Array          # full-K: (P, N, n_tile) ; tiled-K: (KT, NT, k_tile, n_tile)
    n_tile: int
    k_tile: Optional[int]     # None => full-K panels
    n_neuron: int


def prepare_weights(Wab_T, *, n_batch, weight_dtype=jnp.bfloat16,
                    n_tile=None, k_tile=None):
    """Cast (default bf16) + pre-tile Wab.T into contiguous DMA panels.

    Done ONCE at parameter-construction time so the per-step kernel never pays
    for the cast, the transpose, or strided weight DMA.
    """
    # TODO(synk): fp8 (e4m3) weight streaming with per-block scales for v7x
    # (native fp8 MXU path) — would quarter weight HBM traffic vs f32.
    N = Wab_T.shape[0]
    assert Wab_T.shape == (N, N)
    assert N % 128 == 0, "N_NEURON must be a multiple of 128 for this kernel"
    W = Wab_T.astype(weight_dtype)
    wbytes = jnp.dtype(weight_dtype).itemsize
    vmem_limit = _vmem_limit_bytes()

    # Output-neuron tile: large for lane-dense stores / few grid steps, but try
    # to keep >= 2 tiles so the parallel axis can shard across v7x's 2 TCs.
    if n_tile is None:
        n_tile = min(512, max(128, (N // 2) // 128 * 128))
        if N % n_tile != 0:
            n_tile = 128
    assert N % n_tile == 0 and n_tile % 128 == 0

    # VMEM budget for the weight stream = limit - resident full rates
    #   - double-buffered state/output/tau tiles - slack for Mosaic scratch.
    resident = n_batch * N * 4
    per_tile_state = 2 * (5 * n_batch * n_tile * 4 + 4 * n_tile * 4)
    budget = vmem_limit - resident - per_tile_state - (2 << 20)

    full_k = (k_tile is None) and (2 * N * n_tile * wbytes <= budget)
    if full_k:
        P = N // n_tile
        # panel p = W[:, p*n_tile:(p+1)*n_tile], materialized contiguous.
        tiles = W.reshape(N, P, n_tile).transpose(1, 0, 2)
        return PackedWab(tiles, n_tile, None, N)

    if k_tile is None:
        k_tile = 128
        for cand in (2048, 1024, 512, 256, 128):
            # 3-deep buffered weight tile must fit the budget.
            if N % cand == 0 and 3 * cand * n_tile * wbytes <= budget:
                k_tile = cand
                break
    assert N % k_tile == 0 and k_tile % 128 == 0
    KT, NT = N // k_tile, N // n_tile
    # tile (kb, nb) = W[kb*k_tile:(kb+1)*k_tile, nb*n_tile:(nb+1)*n_tile], contiguous.
    tiles = W.reshape(KT, k_tile, NT, n_tile).transpose(0, 2, 1, 3)
    return PackedWab(tiles, n_tile, k_tile, N)


# ---------------------------------------------------------------------------
# Single-step kernel, full-K path: grid = (N // n_tile,)  [output-neuron tiles]
# Each grid step does the complete reduction with one MXU call on a contiguous
# (N, n_tile) panel of the pre-transposed, pre-cast weights.
# ---------------------------------------------------------------------------
def _step_kernel_fullk(
    rates_full_ref,   # (B, N)       full presynaptic rates (MXU LHS, resident)
    wt_ref,           # (1, N, tn)   contiguous pre-transposed weight panel
    rates_i_ref,      # (B, tn)      rates slice for the decay term
    rec_ref,          # (B, tn)      current recurrent input
    ff_ref,           # (B, tn)      feed-forward input
    tau_ref,          # (4, tn)      [EXP_DT_TAU_SYN, DT_TAU_SYN, EXP_DT_TAU, DT_TAU]
    rates_out_ref,    # (B, tn)
    rec_out_ref,      # (B, tn)
    *,
    thresh,
):
    wab_x = jnp.dot(
        rates_full_ref[...].astype(wt_ref.dtype),
        wt_ref[0],
        preferred_element_type=jnp.float32,
    )
    exp_syn = tau_ref[0:1, :]
    dt_syn = tau_ref[1:2, :]
    exp_tau = tau_ref[2:3, :]
    dt_tau = tau_ref[3:4, :]

    rec_new = exp_syn * rec_ref[...] + dt_syn * wab_x          # SYN_DYN, A_u_x = 1
    net = ff_ref[...] + rec_new                                 # VAR_FF[0]==0 -> no noise
    act = jnp.maximum(net - thresh, 0.0)                        # threshold-linear TF
    rates_new = exp_tau * rates_i_ref[...] + dt_tau * act       # RATE_DYN

    rec_out_ref[...] = rec_new.astype(rec_out_ref.dtype)
    rates_out_ref[...] = rates_new.astype(rates_out_ref.dtype)


# ---------------------------------------------------------------------------
# Single-step kernel, tiled-K path (large N): grid = (N // n_tile, N // k_tile)
# ---------------------------------------------------------------------------
def _step_kernel_tiledk(
    rates_k_ref,      # (B, tk)            rates sliced along the reduction axis
    wt_ref,           # (1, 1, tk, tn)     contiguous pre-transposed weight tile
    rates_i_ref,      # (B, tn)
    rec_ref,          # (B, tn)
    ff_ref,           # (B, tn)
    tau_ref,          # (4, tn)
    rates_out_ref,    # (B, tn)
    rec_out_ref,      # (B, tn)
    acc_ref,          # (B, tn) f32 scratch accumulator
    *,
    thresh,
):
    k = pl.program_id(1)

    @pl.when(k == 0)
    def _():
        acc_ref[...] = jnp.zeros_like(acc_ref)

    acc_ref[...] += jnp.dot(
        rates_k_ref[...].astype(wt_ref.dtype),
        wt_ref[0, 0],
        preferred_element_type=jnp.float32,
    )

    @pl.when(k == pl.num_programs(1) - 1)
    def _():
        wab_x = acc_ref[...]
        exp_syn = tau_ref[0:1, :]
        dt_syn = tau_ref[1:2, :]
        exp_tau = tau_ref[2:3, :]
        dt_tau = tau_ref[3:4, :]

        rec_new = exp_syn * rec_ref[...] + dt_syn * wab_x
        net = ff_ref[...] + rec_new
        act = jnp.maximum(net - thresh, 0.0)
        rates_new = exp_tau * rates_i_ref[...] + dt_tau * act

        rec_out_ref[...] = rec_new.astype(rec_out_ref.dtype)
        rates_out_ref[...] = rates_new.astype(rates_out_ref.dtype)


# ---------------------------------------------------------------------------
# Fused multi-step kernel: grid = (T,), Wab.T resident in VMEM across steps,
# state carried in VMEM scratch.  Amortizes the N^2 HBM weight read over the
# whole rollout (dominant cost of the per-step version).
# ---------------------------------------------------------------------------
def _multistep_kernel(
    wt_ref,          # (N, N)    pre-transposed weights, resident (constant index map)
    rates0_ref,      # (B, N)    initial rates
    rec0_ref,        # (B, N)    initial recurrent input
    ff_ref,          # (1, B, N) feed-forward input for this step
    tau_ref,         # (4, N)
    rates_out_ref,   # (B, N)
    rec_out_ref,     # (B, N)
    rates_sc,        # (B, N) f32 scratch state
    rec_sc,          # (B, N) f32 scratch state
    *,
    thresh,
):
    t = pl.program_id(0)

    @pl.when(t == 0)
    def _():
        rates_sc[...] = rates0_ref[...].astype(jnp.float32)
        rec_sc[...] = rec0_ref[...].astype(jnp.float32)

    rates = rates_sc[...]
    rec = rec_sc[...]

    wab_x = jnp.dot(
        rates.astype(wt_ref.dtype), wt_ref[...],
        preferred_element_type=jnp.float32,
    )
    rec_new = tau_ref[0:1, :] * rec + tau_ref[1:2, :] * wab_x
    net = ff_ref[0] + rec_new
    act = jnp.maximum(net - thresh, 0.0)
    rates_new = tau_ref[2:3, :] * rates + tau_ref[3:4, :] * act

    rates_sc[...] = rates_new
    rec_sc[...] = rec_new

    @pl.when(t == pl.num_programs(0) - 1)
    def _():
        rates_out_ref[...] = rates_new.astype(rates_out_ref.dtype)
        rec_out_ref[...] = rec_new.astype(rec_out_ref.dtype)


# ---------------------------------------------------------------------------
# Wrappers
# ---------------------------------------------------------------------------
def network_forward(rates, rec_input, rec_NMDA, ff_input, wab: PackedWab,
                    tau_stack, *, thresh=0.0, weight_buffers=3):
    """One forward step (== Network.forward). Returns (rates, rec_input, rec_NMDA).

    `wab` is a PackedWab built by prepare_weights(): pre-transposed, pre-cast
    (bf16 by default), pre-tiled contiguous weight panels.
    tau_stack is (4, N): [EXP_DT_TAU_SYN, DT_TAU_SYN, EXP_DT_TAU, DT_TAU].
    """
    B, N = rates.shape
    assert wab.n_neuron == N
    assert tau_stack.shape == (4, N)
    n_tile = wab.n_tile
    wdtype = wab.tiles.dtype
    wbytes = jnp.dtype(wdtype).itemsize
    thresh = float(thresh)
    vmem_limit = _vmem_limit_bytes()

    out_shape = (
        jax.ShapeDtypeStruct((B, N), rates.dtype),
        jax.ShapeDtypeStruct((B, N), rec_input.dtype),
    )
    cost = pl.CostEstimate(
        flops=2 * B * N * N,
        transcendentals=0,
        bytes_accessed=N * N * wbytes + 7 * B * N * 4 + 4 * N * 4,
    )

    # NOTE: the per-output-tile decay slice of `rates` is passed as a second
    # (tiny, overlapped) input stream rather than dynamically lane-slicing the
    # resident full-rates ref inside the kernel: B*n_tile*4 B per tile is <6%
    # of the weight panel bytes and avoids a lane-dim dynamic-slice lowering.
    if wab.k_tile is None:
        # ---- full-K path: one MXU call per output tile, no reduction axis ----
        kern = functools.partial(_step_kernel_fullk, thresh=thresh)
        rates_new, rec_new = pl.pallas_call(
            kern,
            out_shape=out_shape,
            grid_spec=pltpu.PrefetchScalarGridSpec(
                num_scalar_prefetch=0,
                grid=(N // n_tile,),
                in_specs=[
                    pl.BlockSpec((B, N), lambda i: (0, 0)),            # rates (full, MXU LHS)
                    pl.BlockSpec((1, N, n_tile), lambda i: (i, 0, 0)), # contiguous Wab.T panel
                    pl.BlockSpec((B, n_tile), lambda i: (0, i)),       # rates (decay slice)
                    pl.BlockSpec((B, n_tile), lambda i: (0, i)),       # rec_input
                    pl.BlockSpec((B, n_tile), lambda i: (0, i)),       # ff_input
                    pl.BlockSpec((4, n_tile), lambda i: (0, i)),       # stacked tau consts
                ],
                out_specs=[
                    pl.BlockSpec((B, n_tile), lambda i: (0, i)),
                    pl.BlockSpec((B, n_tile), lambda i: (0, i)),
                ],
            ),
            compiler_params=pltpu.CompilerParams(
                dimension_semantics=("parallel",),
                vmem_limit_bytes=vmem_limit,
            ),
            cost_estimate=cost,
        )(rates, wab.tiles, rates, rec_input, ff_input, tau_stack)
    else:
        # ---- tiled-K path (large N): big K tiles + 3-deep weight pipeline ----
        k_tile = wab.k_tile
        kern = functools.partial(_step_kernel_tiledk, thresh=thresh)
        if weight_buffers and weight_buffers != 2:
            w_spec = pl.BlockSpec((1, 1, k_tile, n_tile), lambda i, k: (k, i, 0, 0),
                                  pipeline_mode=pl.Buffered(weight_buffers))
        else:
            w_spec = pl.BlockSpec((1, 1, k_tile, n_tile), lambda i, k: (k, i, 0, 0))
        rates_new, rec_new = pl.pallas_call(
            kern,
            out_shape=out_shape,
            grid_spec=pltpu.PrefetchScalarGridSpec(
                num_scalar_prefetch=0,
                grid=(N // n_tile, N // k_tile),
                in_specs=[
                    pl.BlockSpec((B, k_tile), lambda i, k: (0, k)),   # rates (reduction)
                    w_spec,                                           # contiguous Wab.T tile
                    pl.BlockSpec((B, n_tile), lambda i, k: (0, i)),   # rates (decay)
                    pl.BlockSpec((B, n_tile), lambda i, k: (0, i)),   # rec_input
                    pl.BlockSpec((B, n_tile), lambda i, k: (0, i)),   # ff_input
                    pl.BlockSpec((4, n_tile), lambda i, k: (0, i)),   # tau consts
                ],
                out_specs=[
                    pl.BlockSpec((B, n_tile), lambda i, k: (0, i)),
                    pl.BlockSpec((B, n_tile), lambda i, k: (0, i)),
                ],
                scratch_shapes=[pltpu.VMEM((B, n_tile), jnp.float32)],
            ),
            compiler_params=pltpu.CompilerParams(
                dimension_semantics=("parallel", "arbitrary"),
                vmem_limit_bytes=vmem_limit,
            ),
            cost_estimate=cost,
        )(rates, wab.tiles, rates, rec_input, ff_input, tau_stack)

    # rec_NMDA is untouched by forward() in this configuration
    return rates_new, rec_new, rec_NMDA


def network_run_fused(rates0, rec0, ff_seq, Wab_T, tau_stack, *, thresh=0.0,
                      weight_dtype=jnp.bfloat16):
    """Fused T-step rollout with Wab resident in VMEM across steps.

    ff_seq: (T, B, N) per-step feed-forward input.  Returns final (rates, rec).
    Semantically equivalent to calling network_forward T times (bf16-quantized
    weights by default -> small bounded error; accumulation stays f32).
    Only the final state is returned; use the per-step path if every step's
    rates are needed.
    """
    T, B, N = ff_seq.shape
    assert Wab_T.shape == (N, N)
    W = Wab_T.astype(weight_dtype)
    wbytes = jnp.dtype(weight_dtype).itemsize
    vmem_limit = _vmem_limit_bytes()
    # Resident weights + double-buffered ff + state/outputs must fit scoped VMEM.
    need = N * N * wbytes + 6 * B * N * 4 + 4 * N * 4
    assert need <= (vmem_limit * 3) // 4, "N too large for weight-resident rollout"
    # TODO(synk): on v7x, split the output-neuron dim across the two TensorCores
    # (pl.core_map + VMEM_SHARED rates exchange per step) to use both cores and
    # halve the per-core resident weight footprint.

    cost = pl.CostEstimate(
        flops=2 * T * B * N * N,
        transcendentals=0,
        bytes_accessed=N * N * wbytes + T * B * N * 4 + 6 * B * N * 4 + 4 * N * 4,
    )
    kern = functools.partial(_multistep_kernel, thresh=float(thresh))
    rates_f, rec_f = pl.pallas_call(
        kern,
        out_shape=(
            jax.ShapeDtypeStruct((B, N), rates0.dtype),
            jax.ShapeDtypeStruct((B, N), rec0.dtype),
        ),
        grid_spec=pltpu.PrefetchScalarGridSpec(
            num_scalar_prefetch=0,
            grid=(T,),
            in_specs=[
                pl.BlockSpec((N, N), lambda t: (0, 0)),        # Wab.T (resident)
                pl.BlockSpec((B, N), lambda t: (0, 0)),        # initial rates
                pl.BlockSpec((B, N), lambda t: (0, 0)),        # initial rec_input
                pl.BlockSpec((1, B, N), lambda t: (t, 0, 0)),  # ff_input[t]
                pl.BlockSpec((4, N), lambda t: (0, 0)),        # tau consts
            ],
            out_specs=[
                pl.BlockSpec((B, N), lambda t: (0, 0)),
                pl.BlockSpec((B, N), lambda t: (0, 0)),
            ],
            scratch_shapes=[
                pltpu.VMEM((B, N), jnp.float32),
                pltpu.VMEM((B, N), jnp.float32),
            ],
        ),
        compiler_params=pltpu.CompilerParams(
            dimension_semantics=("arbitrary",),
            vmem_limit_bytes=vmem_limit,
        ),
        cost_estimate=cost,
    )(W, rates0, rec0, ff_seq, tau_stack)
    return rates_f, rec_f


# ---------------------------------------------------------------------------
# Deterministic parameter construction (synthetic, mirrors __init__ shapes).
# Returns the PRE-TRANSPOSED weight matrix (Wab.weight.T) and the stacked
# per-neuron time-constant vectors (4, N).
# ---------------------------------------------------------------------------
def build_params(key, n_neuron, n_pop=2, dt=0.05):
    na = [int(n_neuron * f) for f in ([0.75, 0.25] if n_pop == 2 else [1.0])]
    csum = [0]
    for n in na:
        csum.append(csum[-1] + n)
    tau = [20.0, 10.0][:n_pop]
    tau_syn = [4.0, 2.0][:n_pop]
    jab = (jnp.array([[1.0, -1.5], [1.0, -1.0]], jnp.float32)[:n_pop, :n_pop]
           if n_pop == 2 else jnp.array([[1.0]], jnp.float32))

    exp_dt_tau = jnp.ones((n_neuron,), jnp.float32)
    dt_tau = jnp.ones((n_neuron,), jnp.float32)
    exp_dt_tau_syn = jnp.ones((n_neuron,), jnp.float32)
    dt_tau_syn = jnp.ones((n_neuron,), jnp.float32)
    for p in range(n_pop):
        sl = slice(csum[p], csum[p + 1])
        exp_dt_tau = exp_dt_tau.at[sl].set(jnp.exp(-dt / tau[p]))
        dt_tau = dt_tau.at[sl].set(dt / tau[p])
        exp_dt_tau_syn = exp_dt_tau_syn.at[sl].set(jnp.exp(-dt / tau_syn[p]))
        dt_tau_syn = dt_tau_syn.at[sl].set(dt / tau_syn[p])

    # all2all-style block weights: Jab[i,j]/Nb with gaussian heterogeneity.
    # TODO(synk): sparse / low-rank / cosine structured connectivity variants
    # from initWeights are not reproduced; this is the all2all + SIGMA branch.
    wab = jnp.zeros((n_neuron, n_neuron), jnp.float32)
    sigma = 0.1
    for i in range(n_pop):
        for j in range(n_pop):
            key, sub = jax.random.split(key)
            nb = na[j]
            block = jab[i, j] / nb + sigma * jax.random.normal(
                sub, (na[i], nb), jnp.float32) / jnp.sqrt(float(nb))
            wab = wab.at[csum[i]:csum[i + 1], csum[j]:csum[j + 1]].set(block)

    # Pre-transpose ONCE (Linear convention: out = x @ W.T) so the kernel never
    # transposes a tile on the XLU.
    wab_t = wab.T

    tau_stack = jnp.stack([exp_dt_tau_syn, dt_tau_syn, exp_dt_tau, dt_tau], axis=0)
    return wab_t, tau_stack


def reference_forward(rates, rec_input, rec_NMDA, ff_input, Wab_T, tau_stack,
                      thresh=0.0):
    exp_syn, dt_syn, exp_tau, dt_tau = tau_stack
    rec_new = exp_syn[None, :] * rec_input + dt_syn[None, :] * (rates @ Wab_T)
    net = ff_input + rec_new
    act = jnp.maximum(net - thresh, 0.0)
    rates_new = exp_tau[None, :] * rates + dt_tau[None, :] * act
    return rates_new, rec_new, rec_NMDA


if __name__ == "__main__":
    key = jax.random.PRNGKey(0)
    N_BATCH, N_NEURON = 8, 256

    k0, k1, k2, k3, kp = jax.random.split(key, 5)
    rates = jax.random.uniform(k0, (N_BATCH, N_NEURON), jnp.float32)
    rec_input = 0.1 * jax.random.normal(k1, (N_BATCH, N_NEURON), jnp.float32)
    ff_input = jax.random.uniform(k2, (N_BATCH, N_NEURON), jnp.float32)
    rec_NMDA = 0.0  # pass-through, as in the PyTorch module

    Wab_T, tau_stack = build_params(kp, N_NEURON)
    r_ref, rec_ref, _ = reference_forward(
        rates, rec_input, rec_NMDA, ff_input, Wab_T, tau_stack)

    # --- single forward step, full-K path, exact f32 weights (tight check) ---
    wab_f32 = prepare_weights(Wab_T, n_batch=N_BATCH, weight_dtype=jnp.float32)
    assert wab_f32.k_tile is None
    r_a, rec_a, _ = network_forward(
        rates, rec_input, rec_NMDA, ff_input, wab_f32, tau_stack, thresh=0.0)
    jax.block_until_ready((r_a, rec_a))
    assert jnp.allclose(r_a, r_ref, atol=1e-5, rtol=1e-5)
    assert jnp.allclose(rec_a, rec_ref, atol=1e-5, rtol=1e-5)

    # --- full-K path with default bf16 weight streaming -----------------------
    wab_bf16 = prepare_weights(Wab_T, n_batch=N_BATCH)   # bf16 default
    r_b, rec_b, _ = network_forward(
        rates, rec_input, rec_NMDA, ff_input, wab_bf16, tau_stack, thresh=0.0)
    jax.block_until_ready((r_b, rec_b))
    assert jnp.allclose(r_b, r_ref, atol=2e-2, rtol=2e-2)
    assert jnp.allclose(rec_b, rec_ref, atol=2e-2, rtol=2e-2)

    # --- tiled-K path (used for large N; exercised here at small tiles) -------
    wab_tk = prepare_weights(Wab_T, n_batch=N_BATCH, weight_dtype=jnp.float32,
                             n_tile=128, k_tile=128)
    r_c, rec_c, _ = network_forward(
        rates, rec_input, rec_NMDA, ff_input, wab_tk, tau_stack, thresh=0.0)
    jax.block_until_ready((r_c, rec_c))
    assert jnp.allclose(r_c, r_ref, atol=1e-5, rtol=1e-5)
    assert jnp.allclose(rec_c, rec_ref, atol=1e-5, rtol=1e-5)

    wab_tk16 = prepare_weights(Wab_T, n_batch=N_BATCH, n_tile=128, k_tile=128)
    r_d, rec_d, _ = network_forward(
        rates, rec_input, rec_NMDA, ff_input, wab_tk16, tau_stack, thresh=0.0)
    jax.block_until_ready((r_d, rec_d))
    assert jnp.allclose(r_d, r_ref, atol=2e-2, rtol=2e-2)
    assert jnp.allclose(rec_d, rec_ref, atol=2e-2, rtol=2e-2)

    # --- fused multi-step rollout (Wab resident in VMEM across all steps) -----
    T_STEPS = 16
    ff_seq = jax.random.uniform(k3, (T_STEPS, N_BATCH, N_NEURON), jnp.float32)

    r_it, rec_it = rates, rec_input
    for t in range(T_STEPS):
        r_it, rec_it, _ = reference_forward(
            r_it, rec_it, rec_NMDA, ff_seq[t], Wab_T, tau_stack)

    # f32 resident weights (tight check of the rollout logic)
    rf32, recf32 = network_run_fused(
        rates, rec_input, ff_seq, Wab_T, tau_stack, thresh=0.0,
        weight_dtype=jnp.float32)
    jax.block_until_ready((rf32, recf32))
    assert jnp.allclose(rf32, r_it, atol=1e-4, rtol=1e-4)
    assert jnp.allclose(recf32, rec_it, atol=1e-4, rtol=1e-4)

    # default bf16 resident weights (looser tolerance: per-step re-quantization,
    # f32 accumulation keeps the error bounded)
    rbf, recbf = network_run_fused(
        rates, rec_input, ff_seq, Wab_T, tau_stack, thresh=0.0)
    jax.block_until_ready((rbf, recbf))
    assert jnp.allclose(rbf, r_it, atol=3e-2, rtol=3e-2)
    assert jnp.allclose(recbf, rec_it, atol=3e-2, rtol=3e-2)

    print("KERNEL_OK")
</pallas_src>

<mosaic_0001>
module attributes {stable_mosaic.version = 11 : i64} {
  func.func @_step_kernel_fullk(%arg0: i32, %arg1: memref<8x256xf32, #tpu.memory_space<vmem>>, %arg2: memref<1x256x128xf32, #tpu.memory_space<vmem>>, %arg3: memref<8x128xf32, #tpu.memory_space<vmem>>, %arg4: memref<8x128xf32, #tpu.memory_space<vmem>>, %arg5: memref<8x128xf32, #tpu.memory_space<vmem>>, %arg6: memref<4x128xf32, #tpu.memory_space<vmem>>, %arg7: memref<8x128xf32, #tpu.memory_space<vmem>>, %arg8: memref<8x128xf32, #tpu.memory_space<vmem>>) attributes {dimension_semantics = [#tpu.dimension_semantics<parallel>], iteration_bounds = array<i64: 2>, scalar_prefetch = 0 : i64, scratch_operands = 0 : i64, tpu.core_type = #tpu.core_type<tc>, window_params = [{pipeline_mode = #tpu.pipeline_mode<synchronous>, transform_indices = @transform_0, window_bounds = array<i64: 8, 256>}, {transform_indices = @transform_1, window_bounds = array<i64: 1, 256, 128>}, {transform_indices = @transform_2, window_bounds = array<i64: 8, 128>}, {transform_indices = @transform_3, window_bounds = array<i64: 8, 128>}, {transform_indices = @transform_4, window_bounds = array<i64: 8, 128>}, {transform_indices = @transform_5, window_bounds = array<i64: 4, 128>}, {transform_indices = @transform_6, window_bounds = array<i64: 8, 128>}, {transform_indices = @transform_7, window_bounds = array<i64: 8, 128>}]} {
    %c0 = arith.constant 0 : index
    %c0_0 = arith.constant 0 : index
    %0 = vector.load %arg1[%c0, %c0_0] : memref<8x256xf32, #tpu.memory_space<vmem>>, vector<8x256xf32>
    %c0_1 = arith.constant 0 : index
    %c0_2 = arith.constant 0 : index
    %c0_3 = arith.constant 0 : index
    %1 = vector.load %arg2[%c0_1, %c0_2, %c0_3] : memref<1x256x128xf32, #tpu.memory_space<vmem>>, vector<1x256x128xf32>
    %2 = vector.shape_cast %1 : vector<1x256x128xf32> to vector<256x128xf32>
    %cst = arith.constant dense<0.000000e+00> : vector<8x128xf32>
    %3 = tpu.matmul %0, %2, %cst {dimension_numbers = #tpu.dot_dimension_numbers<[1], [0], [0], [1], [0, 0, 1, 1], [], []>} : vector<8x256xf32>, vector<256x128xf32>, vector<8x128xf32> -> vector<8x128xf32>
    %c0_4 = arith.constant 0 : index
    %c0_5 = arith.constant 0 : index
    %4 = vector.load %arg6[%c0_4, %c0_5] : memref<4x128xf32, #tpu.memory_space<vmem>>, vector<1x128xf32>
    %c1 = arith.constant 1 : index
    %c0_6 = arith.constant 0 : index
    %5 = vector.load %arg6[%c1, %c0_6] : memref<4x128xf32, #tpu.memory_space<vmem>>, vector<1x128xf32>
    %c2 = arith.constant 2 : index
    %c0_7 = arith.constant 0 : index
    %6 = vector.load %arg6[%c2, %c0_7] : memref<4x128xf32, #tpu.memory_space<vmem>>, vector<1x128xf32>
    %c3 = arith.constant 3 : index
    %c0_8 = arith.constant 0 : index
    %7 = vector.load %arg6[%c3, %c0_8] : memref<4x128xf32, #tpu.memory_space<vmem>>, vector<1x128xf32>
    %c0_9 = arith.constant 0 : index
    %c0_10 = arith.constant 0 : index
    %8 = vector.load %arg4[%c0_9, %c0_10] : memref<8x128xf32, #tpu.memory_space<vmem>>, vector<8x128xf32>
    %9 = vector.broadcast %4 : vector<1x128xf32> to vector<8x128xf32>
    %10 = arith.mulf %9, %8 : vector<8x128xf32>
    %11 = vector.broadcast %5 : vector<1x128xf32> to vector<8x128xf32>
    %12 = arith.mulf %11, %3 : vector<8x128xf32>
    %13 = arith.addf %10, %12 : vector<8x128xf32>
    %c0_11 = arith.constant 0 : index
    %c0_12 = arith.constant 0 : index
    %14 = vector.load %arg5[%c0_11, %c0_12] : memref<8x128xf32, #tpu.memory_space<vmem>>, vector<8x128xf32>
    %15 = arith.addf %14, %13 : vector<8x128xf32>
    %cst_13 = arith.constant 0.000000e+00 : f32
    %16 = vector.broadcast %cst_13 : f32 to vector<8x128xf32>
    %17 = arith.subf %15, %16 : vector<8x128xf32>
    %cst_14 = arith.constant 0.000000e+00 : f32
    %18 = vector.broadcast %cst_14 : f32 to vector<8x128xf32>
    %19 = arith.maximumf %17, %18 : vector<8x128xf32>
    %c0_15 = arith.constant 0 : index
    %c0_16 = arith.constant 0 : index
    %20 = vector.load %arg3[%c0_15, %c0_16] : memref<8x128xf32, #tpu.memory_space<vmem>>, vector<8x128xf32>
    %21 = vector.broadcast %6 : vector<1x128xf32> to vector<8x128xf32>
    %22 = arith.mulf %21, %20 : vector<8x128xf32>
    %23 = vector.broadcast %7 : vector<1x128xf32> to vector<8x128xf32>
    %24 = arith.mulf %23, %19 : vector<8x128xf32>
    %25 = arith.addf %22, %24 : vector<8x128xf32>
    %c0_17 = arith.constant 0 : index
    %c0_18 = arith.constant 0 : index
    %26 = vector.load %arg8[%c0_17, %c0_18] : memref<8x128xf32, #tpu.memory_space<vmem>>, vector<8x128xf32>
    tpu.vector_store %arg8[%c0_17, %c0_18], %13 {strides = array<i32>} : memref<8x128xf32, #tpu.memory_space<vmem>>, vector<8x128xf32>,
    %c0_19 = arith.constant 0 : index
    %c0_20 = arith.constant 0 : index
    %27 = vector.load %arg7[%c0_19, %c0_20] : memref<8x128xf32, #tpu.memory_space<vmem>>, vector<8x128xf32>
    tpu.vector_store %arg7[%c0_19, %c0_20], %25 {strides = array<i32>} : memref<8x128xf32, #tpu.memory_space<vmem>>, vector<8x128xf32>,
    return
  }
  func.func @transform_0(%arg0: i32) -> (i32, i32) {
    %c0_i32 = arith.constant 0 : i32
    %c0_i32_0 = arith.constant 0 : i32
    %c0_i32_1 = arith.constant 0 : i32
    return %c0_i32, %c0_i32_0 : i32, i32
  }
  func.func @transform_1(%arg0: i32) -> (i32, i32, i32) {
    %c0_i32 = arith.constant 0 : i32
    %c0_i32_0 = arith.constant 0 : i32
    %c0_i32_1 = arith.constant 0 : i32
    return %arg0, %c0_i32, %c0_i32_0 : i32, i32, i32
  }
  func.func @transform_2(%arg0: i32) -> (i32, i32) {
    %c0_i32 = arith.constant 0 : i32
    %c0_i32_0 = arith.constant 0 : i32
    return %c0_i32, %arg0 : i32, i32
  }
  func.func @transform_3(%arg0: i32) -> (i32, i32) {
    %c0_i32 = arith.constant 0 : i32
    %c0_i32_0 = arith.constant 0 : i32
    return %c0_i32, %arg0 : i32, i32
  }
  func.func @transform_4(%arg0: i32) -> (i32, i32) {
    %c0_i32 = arith.constant 0 : i32
    %c0_i32_0 = arith.constant 0 : i32
    return %c0_i32, %arg0 : i32, i32
  }
  func.func @transform_5(%arg0: i32) -> (i32, i32) {
    %c0_i32 = arith.constant 0 : i32
    %c0_i32_0 = arith.constant 0 : i32
    return %c0_i32, %arg0 : i32, i32
  }
  func.func @transform_6(%arg0: i32) -> (i32, i32) {
    %c0_i32 = arith.constant 0 : i32
    %c0_i32_0 = arith.constant 0 : i32
    return %c0_i32, %arg0 : i32, i32
  }
  func.func @transform_7(%arg0: i32) -> (i32, i32) {
    %c0_i32 = arith.constant 0 : i32
    %c0_i32_0 = arith.constant 0 : i32
    return %c0_i32, %arg0 : i32, i32
  }
}

</mosaic_0001>

<llo_original>
// kernel: tpu_custom_call.1
$region0: #{tpu_custom_call.1}
  #allocation0 [shape = 'u32[]', space=smem, size = 0x4, offset = 0x4, fixed_abs, tag = 'smem constant byte address 0x4 - core index']
  #allocation1 [shape = 'u32[144,128]{1,0:T(1,128)}', space=vmem, size = 0x12000, scoped, tag = 'internal scratch']
  %s0 = inlined_call_operand.hbm [shape: f32[8,256], index: 0, kind: input, shape index: {}]
  %s1 = inlined_call_operand.hbm [shape: f32[2,256,128], index: 1, kind: input, shape index: {}]
  %s2 = inlined_call_operand.hbm [shape: f32[8,256], index: 2, kind: input, shape index: {}]
  %s3 = inlined_call_operand.hbm [shape: f32[8,256], index: 3, kind: input, shape index: {}]
  %s4 = inlined_call_operand.hbm [shape: f32[8,256], index: 4, kind: input, shape index: {}]
  %s5 = inlined_call_operand.vmem [shape: f32[4,256], index: 5, kind: input, shape index: {}]
  %s6 = inlined_call_operand.hbm [shape: f32[8,256], index: 6, kind: output, shape index: {0}]
  %s7 = inlined_call_operand.hbm [shape: f32[8,256], index: 7, kind: output, shape index: {1}]
  %8 = xla_tuple %s6, %s7
  %s9 = sld [smem:[#allocation0]]
  $region85: #{tpu_custom_call.1} parent=0
    _
  %s11 = ssub.s32 1, %s9
  %s12 = scalar_select 0, %s11, %s9
  $region1: #{tpu_custom_call.1} parent=0
    #allocation2 [shape = 'u8[8192]{0}', space=vmem, size = 0x2000, scoped, tag = 'input window, operand 0, single buffered']
    #allocation3 [shape = 's32[2]{0}', space=sflag, size = 0x8, scoped, tag = 'scoped memory for tpu_custom_call.1']
    #allocation4 [shape = 's32[2]{0}', space=sflag, size = 0x8, scoped, tag = 'scoped memory for tpu_custom_call.1']
    #allocation5 [shape = 'u8[262144]{0}', space=vmem, size = 0x40000, scoped, tag = 'input window, operand 1']
    #allocation6 [shape = 's32[2]{0}', space=sflag, size = 0x8, scoped, tag = 'scoped memory for tpu_custom_call.1']
    #allocation7 [shape = 'u8[8192]{0}', space=vmem, size = 0x2000, scoped, tag = 'input window, operand 2']
    #allocation8 [shape = 'u8[8192]{0}', space=vmem, size = 0x2000, scoped, tag = 'input window, operand 3']
    #allocation9 [shape = 's32[2]{0}', space=sflag, size = 0x8, scoped, tag = 'scoped memory for tpu_custom_call.1']
    #allocation10 [shape = 'u8[8192]{0}', space=vmem, size = 0x2000, scoped, tag = 'input window, operand 4']
    #allocation11 [shape = 'u8[8192]{0}', space=vmem, size = 0x2000, scoped, tag = 'output window, operand 0']
    #allocation12 [shape = 'u8[8192]{0}', space=vmem, size = 0x2000, scoped, tag = 'output window, operand 1']
    #allocation13 [shape = 's32[2]{0}', space=sflag, size = 0x8, scoped, tag = 'scoped memory for tpu_custom_call.1']
    %13 = vsyncpa [#allocation3], 0
    %14 = vsyncpa [#allocation6], 0
    %s15 = scalar_lea.sflag [#allocation6], 1
    %16 = vsyncpa %s15, 0
    %17 = vsyncpa [#allocation9], 0
    %s18 = scalar_lea.sflag [#allocation9], 1
    %19 = vsyncpa %s18, 0
    %20 = vsyncpa [#allocation4], 0
    %s21 = scalar_lea.sflag [#allocation4], 1
    %22 = vsyncpa %s21, 0
    %23 = vsyncpa [#allocation13], 0
    %s24 = scalar_lea.sflag [#allocation13], 1
    %25 = vsyncpa %s24, 0
    loop: start=0, step=1, limit=4
    $region2: #{tpu_custom_call.1} parent=1 // loop_pre_header
      _
    $region3: #{tpu_custom_call.1} parent=1 // loop_header
      %s27 = sphi 0, %s31
      %p28 = scmp.ge.s32.totalorder %s27, 4
      %s35 = sphi 0, %s35
      %s37 = sphi 0, %s35
      %s38 = sphi 0, %s37
      %s52 = sphi 0, %s38
      %s58 = sphi 0, %s60
      %s61 = sphi 0, %s58
      %s62 = sphi 0, %s61
      %s78 = sphi 0, %s62
      %s84 = sphi 0, %s86
      %s87 = sphi 0, %s84
      %s88 = sphi 0, %s87
      %s104 = sphi 0, %s88
      %s110 = sphi 0, %s112
      %s113 = sphi 0, %s110
      %s114 = sphi 0, %s113
      %s130 = sphi 0, %s114
      %s136 = sphi 0, %s138
      %s139 = sphi 0, %s136
      %s140 = sphi 0, %s139
      %s156 = sphi 0, %s140
      %s162 = sphi 0, %s164
      %s165 = sphi 0, %s162
      %s166 = sphi 0, %s165
      %s182 = sphi 0, %s166
      %s188 = sphi 0, %s190
      %s191 = sphi 0, %s188
      %s192 = sphi 0, %s191
      %s208 = sphi 0, %s192
      %s214 = sphi 0, %s216
      %s217 = sphi 0, %s214
      %s218 = sphi 0, %s217
      %s234 = sphi 0, %s218
    $region4: #{tpu_custom_call.1} parent=1 // loop_header_branch
      %30 = sbr.rel (%p28) target = $region8
    $region5: #{tpu_custom_call.1} parent=1 // loop_body
      %s32 = ssub.s32 %s27, 1
      %s33 = ssub.s32 %s27, 2
      %s34 = sadd.s32 %s27, 1
      %s36 = sadd.s32 %s35, 1
      %p39 = scmp.eq.s32.totalorder %s27, 1
      %p40 = scmp.ne.s32.totalorder %s35, %s37
      %p41 = scmp.eq.s32.totalorder %s27, 0
      %p42 = por %p40, %p41
      %p43 = scmp.ne.s32.totalorder %s35, %s37
      %p44 = scmp.eq.s32.totalorder %s32, 1
      %p45 = por %p43, %p44
      %p46 = scmp.ne.s32.totalorder %s37, %s38
      %p47 = scmp.eq.s32.totalorder %s32, 0
      %p48 = por %p46, %p47
      %p49 = scmp.ne.s32.totalorder %s37, %s38
      %p50 = scmp.eq.s32.totalorder %s33, 1
      %p51 = por %p49, %p50
      %p53 = scmp.ne.s32.totalorder %s38, %s52
      %p54 = scmp.eq.s32.totalorder %s33, 0
      %p55 = por %p53, %p54
      %s56 = ssub.s32 %s27, %s34
      %p57 = scmp.eq.s32.totalorder %s56, 0
      %s59 = sadd.s32 %s58, 1
      %s60 = scalar_select %p57, %s58, %s59
      %p63 = pneg %p57
      %p64 = scmp.eq.s32.totalorder %s27, 1
      %p65 = por %p63, %p64
      %p66 = scmp.ne.s32.totalorder %s58, %s61
      %p67 = scmp.eq.s32.totalorder %s27, 0
      %p68 = por %p66, %p67
      %p69 = scmp.ne.s32.totalorder %s58, %s61
      %p70 = scmp.eq.s32.totalorder %s32, 1
      %p71 = por %p69, %p70
      %p72 = scmp.ne.s32.totalorder %s61, %s62
      %p73 = scmp.eq.s32.totalorder %s32, 0
      %p74 = por %p72, %p73
      %p75 = scmp.ne.s32.totalorder %s61, %s62
      %p76 = scmp.eq.s32.totalorder %s33, 1
      %p77 = por %p75, %p76
      %p79 = scmp.ne.s32.totalorder %s62, %s78
      %p80 = scmp.eq.s32.totalorder %s33, 0
      %p81 = por %p79, %p80
      %s82 = ssub.s32 %s27, %s34
      %p83 = scmp.eq.s32.totalorder %s82, 0
      %s85 = sadd.s32 %s84, 1
      %s86 = scalar_select %p83, %s84, %s85
      %p89 = pneg %p83
      %p90 = scmp.eq.s32.totalorder %s27, 1
      %p91 = por %p89, %p90
      %p92 = scmp.ne.s32.totalorder %s84, %s87
      %p93 = scmp.eq.s32.totalorder %s27, 0
      %p94 = por %p92, %p93
      %p95 = scmp.ne.s32.totalorder %s84, %s87
      %p96 = scmp.eq.s32.totalorder %s32, 1
      %p97 = por %p95, %p96
      %p98 = scmp.ne.s32.totalorder %s87, %s88
      %p99 = scmp.eq.s32.totalorder %s32, 0
      %p100 = por %p98, %p99
      %p101 = scmp.ne.s32.totalorder %s87, %s88
      %p102 = scmp.eq.s32.totalorder %s33, 1
      %p103 = por %p101, %p102
      %p105 = scmp.ne.s32.totalorder %s88, %s104
      %p106 = scmp.eq.s32.totalorder %s33, 0
      %p107 = por %p105, %p106
      %s108 = ssub.s32 %s27, %s34
      %p109 = scmp.eq.s32.totalorder %s108, 0
      %s111 = sadd.s32 %s110, 1
      %s112 = scalar_select %p109, %s110, %s111
      %p115 = pneg %p109
      %p116 = scmp.eq.s32.totalorder %s27, 1
      %p117 = por %p115, %p116
      %p118 = scmp.ne.s32.totalorder %s110, %s113
      %p119 = scmp.eq.s32.totalorder %s27, 0
      %p120 = por %p118, %p119
      %p121 = scmp.ne.s32.totalorder %s110, %s113
      %p122 = scmp.eq.s32.totalorder %s32, 1
      %p123 = por %p121, %p122
      %p124 = scmp.ne.s32.totalorder %s113, %s114
      %p125 = scmp.eq.s32.totalorder %s32, 0
      %p126 = por %p124, %p125
      %p127 = scmp.ne.s32.totalorder %s113, %s114
      %p128 = scmp.eq.s32.totalorder %s33, 1
      %p129 = por %p127, %p128
      %p131 = scmp.ne.s32.totalorder %s114, %s130
      %p132 = scmp.eq.s32.totalorder %s33, 0
      %p133 = por %p131, %p132
      %s134 = ssub.s32 %s27, %s34
      %p135 = scmp.eq.s32.totalorder %s134, 0
      %s137 = sadd.s32 %s136, 1
      %s138 = scalar_select %p135, %s136, %s137
      %p141 = pneg %p135
      %p142 = scmp.eq.s32.totalorder %s27, 1
      %p143 = por %p141, %p142
      %p144 = scmp.ne.s32.totalorder %s136, %s139
      %p145 = scmp.eq.s32.totalorder %s27, 0
      %p146 = por %p144, %p145
      %p147 = scmp.ne.s32.totalorder %s136, %s139
      %p148 = scmp.eq.s32.totalorder %s32, 1
      %p149 = por %p147, %p148
      %p150 = scmp.ne.s32.totalorder %s139, %s140
      %p151 = scmp.eq.s32.totalorder %s32, 0
      %p152 = por %p150, %p151
      %p153 = scmp.ne.s32.totalorder %s139, %s140
      %p154 = scmp.eq.s32.totalorder %s33, 1
      %p155 = por %p153, %p154
      %p157 = scmp.ne.s32.totalorder %s140, %s156
      %p158 = scmp.eq.s32.totalorder %s33, 0
      %p159 = por %p157, %p158
      %s160 = ssub.s32 %s27, %s34
      %p161 = scmp.eq.s32.totalorder %s160, 0
      %s163 = sadd.s32 %s162, 1
      %s164 = scalar_select %p161, %s162, %s163
      %p167 = pneg %p161
      %p168 = scmp.eq.s32.totalorder %s27, 1
      %p169 = por %p167, %p168
      %p170 = scmp.ne.s32.totalorder %s162, %s165
      %p171 = scmp.eq.s32.totalorder %s27, 0
      %p172 = por %p170, %p171
      %p173 = scmp.ne.s32.totalorder %s162, %s165
      %p174 = scmp.eq.s32.totalorder %s32, 1
      %p175 = por %p173, %p174
      %p176 = scmp.ne.s32.totalorder %s165, %s166
      %p177 = scmp.eq.s32.totalorder %s32, 0
      %p178 = por %p176, %p177
      %p179 = scmp.ne.s32.totalorder %s165, %s166
      %p180 = scmp.eq.s32.totalorder %s33, 1
      %p181 = por %p179, %p180
      %p183 = scmp.ne.s32.totalorder %s166, %s182
      %p184 = scmp.eq.s32.totalorder %s33, 0
      %p185 = por %p183, %p184
      %s186 = ssub.s32 %s27, %s34
      %p187 = scmp.eq.s32.totalorder %s186, 0
      %s189 = sadd.s32 %s188, 1
      %s190 = scalar_select %p187, %s188, %s189
      %p193 = pneg %p187
      %p194 = scmp.eq.s32.totalorder %s27, 1
      %p195 = por %p193, %p194
      %p196 = scmp.ne.s32.totalorder %s188, %s191
      %p197 = scmp.eq.s32.totalorder %s27, 0
      %p198 = por %p196, %p197
      %p199 = scmp.ne.s32.totalorder %s188, %s191
      %p200 = scmp.eq.s32.totalorder %s32, 1
      %p201 = por %p199, %p200
      %p202 = scmp.ne.s32.totalorder %s191, %s192
      %p203 = scmp.eq.s32.totalorder %s32, 0
      %p204 = por %p202, %p203
      %p205 = scmp.ne.s32.totalorder %s191, %s192
      %p206 = scmp.eq.s32.totalorder %s33, 1
      %p207 = por %p205, %p206
      %p209 = scmp.ne.s32.totalorder %s192, %s208
      %p210 = scmp.eq.s32.totalorder %s33, 0
      %p211 = por %p209, %p210
      %s212 = ssub.s32 %s27, %s34
      %p213 = scmp.eq.s32.totalorder %s212, 0
      %s215 = sadd.s32 %s214, 1
      %s216 = scalar_select %p213, %s214, %s215
      %p219 = pneg %p213
      %p220 = scmp.eq.s32.totalorder %s27, 1
      %p221 = por %p219, %p220
      %p222 = scmp.ne.s32.totalorder %s214, %s217
      %p223 = scmp.eq.s32.totalorder %s27, 0
      %p224 = por %p222, %p223
      %p225 = scmp.ne.s32.totalorder %s214, %s217
      %p226 = scmp.eq.s32.totalorder %s32, 1
      %p227 = por %p225, %p226
      %p228 = scmp.ne.s32.totalorder %s217, %s218
      %p229 = scmp.eq.s32.totalorder %s32, 0
      %p230 = por %p228, %p229
      %p231 = scmp.ne.s32.totalorder %s217, %s218
      %p232 = scmp.eq.s32.totalorder %s33, 1
      %p233 = por %p231, %p232
      %p235 = scmp.ne.s32.totalorder %s218, %s234
      %p236 = scmp.eq.s32.totalorder %s33, 0
      %p237 = por %p235, %p236
      %p238 = scmp.le.s32.totalorder 1, %s27
      %p239 = scmp.lt.s32.totalorder %s27, 3
      %p240 = pnand %p238, %p239
      %p241 = pneg %p240
      // Predicated region
      $region9: #{tpu_custom_call.1} parent=5 // pred_check
        _
      $region10: #{tpu_custom_call.1} parent=5 // pred_check_branch
        %243 = sbr.rel (%p240) target = $region12
      $region11: #{tpu_custom_call.1} parent=5 // pred_region
        %s244 = ssub.s32 %s27, 1
        // Predicated region
        $region13: #{tpu_custom_call.1} parent=11 // pred_check
          %p245 = pneg %p48
        $region14: #{tpu_custom_call.1} parent=11 // pred_check_branch
          %247 = sbr.rel (%p245) target = $region16
        $region15: #{tpu_custom_call.1} parent=11 // pred_region
          %s249 = ssub.s32 256, 256
          %250 = vsyncadd [#allocation3], %s249
          %s252 = sshll.u32 [#allocation2], 4
          %s253 = int_to_ptr.vmem [resolvable:$true] %s252
          %255 = dma.hbm_to_vmem [thread:$0]  %s0, 256, %s253, [#allocation3]
        $region16: #{tpu_custom_call.1} parent=11 // pred_fallthru
          _
      $region12: #{tpu_custom_call.1} parent=5 // pred_fallthru
        _
      %p256 = scmp.lt.s32.totalorder %s27, 2
      // Predicated region
      $region17: #{tpu_custom_call.1} parent=5 // pred_check
        %p257 = pneg %p256
      $region18: #{tpu_custom_call.1} parent=5 // pred_check_branch
        %259 = sbr.rel (%p257) target = $region20
      $region19: #{tpu_custom_call.1} parent=5 // pred_region
        // Predicated region
        $region21: #{tpu_custom_call.1} parent=19 // pred_check
          %p260 = pneg %p68
        $region22: #{tpu_custom_call.1} parent=19 // pred_check_branch
          %262 = sbr.rel (%p260) target = $region24
        $region23: #{tpu_custom_call.1} parent=19 // pred_region
          %s263 = sand.u32 %s27, 1
          %s264 = scalar_lea.sflag [#allocation6], %s263
          %s265 = sand.u32 %s58, 1
          %s266 = smul.addr %s265, 256
          %s267 = scalar_lea.vmem [#allocation5], %s266
          %s269 = ssub.s32 4096, 4096
          %270 = vsyncadd %s264, %s269
          %s271 = smul.addr %s27, 32
          %s272 = smul.addr %s271, 128
          %s273 = scalar_lea.hbm %s1, %s272
          %s274 = sshll.u32 %s267, 4
          %s275 = int_to_ptr.vmem [resolvable:$true] %s274
          %280 = dma.hbm_to_vmem [thread:$0]  %s273, 4096, %s275, %s264, 128, 128, 8
        $region24: #{tpu_custom_call.1} parent=19 // pred_fallthru
          _
        // Predicated region
        $region25: #{tpu_custom_call.1} parent=19 // pred_check
          %p281 = pneg %p94
        $region26: #{tpu_custom_call.1} parent=19 // pred_check_branch
          %283 = sbr.rel (%p281) target = $region28
        $region27: #{tpu_custom_call.1} parent=19 // pred_region
          %s284 = sand.u32 %s27, 1
          %s285 = scalar_lea.sflag [#allocation6], %s284
          %s286 = sand.u32 %s84, 1
          %s287 = smul.addr %s286, 8
          %s288 = scalar_lea.vmem [#allocation7], %s287
          %s290 = ssub.s32 128, 128
          %291 = vsyncadd %s285, %s290
          %s292 = smul.addr %s27, 128
          %s293 = scalar_lea.hbm %s2, %s292
          %s295 = sshll.u32 %s288, 4
          %s296 = int_to_ptr.vmem [resolvable:$true] %s295
          %298 = dma.hbm_to_vmem [thread:$0]  %s293, 128, %s296, %s285
        $region28: #{tpu_custom_call.1} parent=19 // pred_fallthru
          _
        // Predicated region
        $region29: #{tpu_custom_call.1} parent=19 // pred_check
          %p299 = pneg %p120
        $region30: #{tpu_custom_call.1} parent=19 // pred_check_branch
          %301 = sbr.rel (%p299) target = $region32
        $region31: #{tpu_custom_call.1} parent=19 // pred_region
          %s302 = sand.u32 %s27, 1
          %s303 = scalar_lea.sflag [#allocation9], %s302
          %s304 = sand.u32 %s110, 1
          %s305 = smul.addr %s304, 8
          %s306 = scalar_lea.vmem [#allocation8], %s305
          %s308 = ssub.s32 128, 128
          %309 = vsyncadd %s303, %s308
          %s310 = smul.addr %s27, 128
          %s311 = scalar_lea.hbm %s3, %s310
          %s313 = sshll.u32 %s306, 4
          %s314 = int_to_ptr.vmem [resolvable:$true] %s313
          %316 = dma.hbm_to_vmem [thread:$0]  %s311, 128, %s314, %s303
        $region32: #{tpu_custom_call.1} parent=19 // pred_fallthru
          _
        // Predicated region
        $region33: #{tpu_custom_call.1} parent=19 // pred_check
          %p317 = pneg %p146
        $region34: #{tpu_custom_call.1} parent=19 // pred_check_branch
          %319 = sbr.rel (%p317) target = $region36
        $region35: #{tpu_custom_call.1} parent=19 // pred_region
          %s320 = sand.u32 %s27, 1
          %s321 = scalar_lea.sflag [#allocation9], %s320
          %s322 = sand.u32 %s136, 1
          %s323 = smul.addr %s322, 8
          %s324 = scalar_lea.vmem [#allocation10], %s323
          %s326 = ssub.s32 128, 128
          %327 = vsyncadd %s321, %s326
          %s328 = smul.addr %s27, 128
          %s329 = scalar_lea.hbm %s4, %s328
          %s331 = sshll.u32 %s324, 4
          %s332 = int_to_ptr.vmem [resolvable:$true] %s331
          %334 = dma.hbm_to_vmem [thread:$0]  %s329, 128, %s332, %s321
        $region36: #{tpu_custom_call.1} parent=19 // pred_fallthru
          _
        // Predicated region
        $region37: #{tpu_custom_call.1} parent=19 // pred_check
          %p335 = pneg %p172
        $region38: #{tpu_custom_call.1} parent=19 // pred_check_branch
          %337 = sbr.rel (%p335) target = $region40
        $region39: #{tpu_custom_call.1} parent=19 // pred_region
          %p338 = scmp.lt.s32.totalorder %s27, 1
          %s339 = scalar_select %p338, %s27, 1
          %s340 = smul.addr %s339, 4
          %s341 = scalar_lea.vmem %s5, %s340
        $region40: #{tpu_custom_call.1} parent=19 // pred_fallthru
          _
      $region20: #{tpu_custom_call.1} parent=5 // pred_fallthru
        _
      %p342 = scmp.le.s32.totalorder 1, %s27
      %p343 = scmp.lt.s32.totalorder %s27, 3
      %p344 = pnand %p342, %p343
      %p345 = pneg %p344
      // Predicated region
      $region41: #{tpu_custom_call.1} parent=5 // pred_check
        _
      $region42: #{tpu_custom_call.1} parent=5 // pred_check_branch
        %347 = sbr.rel (%p344) target = $region44
      $region43: #{tpu_custom_call.1} parent=5 // pred_region
        %s348 = ssub.s32 %s27, 1
        // Predicated region
        $region45: #{tpu_custom_call.1} parent=43 // pred_check
          %p349 = pneg %p48
        $region46: #{tpu_custom_call.1} parent=43 // pred_check_branch
          %351 = sbr.rel (%p349) target = $region48
        $region47: #{tpu_custom_call.1} parent=43 // pred_region
          %352 = dma.done [#allocation3], 256
        $region48: #{tpu_custom_call.1} parent=43 // pred_fallthru
          _
        %s353 = sand.u32 %s32, 1
        %s354 = scalar_lea.sflag [#allocation6], %s353
        %s355 = sand.u32 %s61, 1
        %s356 = smul.addr %s355, 256
        %s357 = scalar_lea.vmem [#allocation5], %s356
        // Predicated region
        $region49: #{tpu_custom_call.1} parent=43 // pred_check
          %p358 = pneg %p74
        $region50: #{tpu_custom_call.1} parent=43 // pred_check_branch
          %360 = sbr.rel (%p358) target = $region52
        $region51: #{tpu_custom_call.1} parent=43 // pred_region
          %361 = dma.done %s354, 4096
        $region52: #{tpu_custom_call.1} parent=43 // pred_fallthru
          _
        %s362 = sand.u32 %s32, 1
        %s363 = scalar_lea.sflag [#allocation6], %s362
        %s364 = sand.u32 %s87, 1
        %s365 = smul.addr %s364, 8
        %s366 = scalar_lea.vmem [#allocation7], %s365
        // Predicated region
        $region53: #{tpu_custom_call.1} parent=43 // pred_check
          %p367 = pneg %p100
        $region54: #{tpu_custom_call.1} parent=43 // pred_check_branch
          %369 = sbr.rel (%p367) target = $region56
        $region55: #{tpu_custom_call.1} parent=43 // pred_region
          %370 = dma.done %s363, 128
        $region56: #{tpu_custom_call.1} parent=43 // pred_fallthru
          _
        %s371 = sand.u32 %s32, 1
        %s372 = scalar_lea.sflag [#allocation9], %s371
        %s373 = sand.u32 %s113, 1
        %s374 = smul.addr %s373, 8
        %s375 = scalar_lea.vmem [#allocation8], %s374
        // Predicated region
        $region57: #{tpu_custom_call.1} parent=43 // pred_check
          %p376 = pneg %p126
        $region58: #{tpu_custom_call.1} parent=43 // pred_check_branch
          %378 = sbr.rel (%p376) target = $region60
        $region59: #{tpu_custom_call.1} parent=43 // pred_region
          %379 = dma.done %s372, 128
        $region60: #{tpu_custom_call.1} parent=43 // pred_fallthru
          _
        %s380 = sand.u32 %s32, 1
        %s381 = scalar_lea.sflag [#allocation9], %s380
        %s382 = sand.u32 %s139, 1
        %s383 = smul.addr %s382, 8
        %s384 = scalar_lea.vmem [#allocation10], %s383
        // Predicated region
        $region61: #{tpu_custom_call.1} parent=43 // pred_check
          %p385 = pneg %p152
        $region62: #{tpu_custom_call.1} parent=43 // pred_check_branch
          %387 = sbr.rel (%p385) target = $region64
        $region63: #{tpu_custom_call.1} parent=43 // pred_region
          %388 = dma.done %s381, 128
        $region64: #{tpu_custom_call.1} parent=43 // pred_fallthru
          _
        %p389 = pneg %p48
        %p390 = pneg %p45
        %s391 = sand.u32 %s32, 1
        %s392 = scalar_lea.sflag [#allocation6], %s391
        %s393 = sand.u32 %s61, 1
        %s394 = smul.addr %s393, 256
        %s395 = scalar_lea.vmem [#allocation5], %s394
        %p396 = pneg %p74
        %p397 = pneg %p71
        %s398 = sand.u32 %s32, 1
        %s399 = scalar_lea.sflag [#allocation6], %s398
        %s400 = sand.u32 %s87, 1
        %s401 = smul.addr %s400, 8
        %s402 = scalar_lea.vmem [#allocation7], %s401
        %p403 = pneg %p100
        %p404 = pneg %p97
        %s405 = sand.u32 %s32, 1
        %s406 = scalar_lea.sflag [#allocation9], %s405
        %s407 = sand.u32 %s113, 1
        %s408 = smul.addr %s407, 8
        %s409 = scalar_lea.vmem [#allocation8], %s408
        %p410 = pneg %p126
        %p411 = pneg %p123
        %s412 = sand.u32 %s32, 1
        %s413 = scalar_lea.sflag [#allocation9], %s412
        %s414 = sand.u32 %s139, 1
        %s415 = smul.addr %s414, 8
        %s416 = scalar_lea.vmem [#allocation10], %s415
        %p417 = pneg %p152
        %p418 = pneg %p149
        %p419 = scmp.lt.s32.totalorder %s32, 1
        %s420 = scalar_select %p419, %s32, 1
        %s421 = smul.addr %s420, 4
        %s422 = scalar_lea.vmem %s5, %s421
        %p423 = pneg %p178
        %p424 = pneg %p175
        %p425 = pneg %p204
        %p426 = pneg %p201
        %s427 = sand.u32 %s191, 1
        %s428 = scalar_lea.sflag [#allocation4], %s427
        %s429 = sand.u32 %s191, 1
        %s430 = smul.addr %s429, 8
        %s431 = scalar_lea.vmem [#allocation11], %s430
        %p432 = pneg %p230
        %p433 = pneg %p227
        %s434 = sand.u32 %s217, 1
        %s435 = scalar_lea.sflag [#allocation13], %s434
        %s436 = sand.u32 %s217, 1
        %s437 = smul.addr %s436, 8
        %s438 = scalar_lea.vmem [#allocation12], %s437
        %p439 = scmp.lt.s32.totalorder %s32, 1
        %s440 = scalar_select %p439, %s32, 1
        %s441 = smul.addr %s440, 4
        %s442 = scalar_lea.vmem %s5, %s441
        %v443 = vld [vmem:[#allocation2] sm:$0xff]
        %v444 = vld [vmem:[#allocation2 + $0x8] sm:$0xff]
        %v445 = vld [vmem:[%s357] sm:$0xff]
        %v446 = vld [vmem:[%s357 + $0x8] sm:$0xff]
        %v447 = vld [vmem:[%s357 + $0x10] sm:$0xff]
        %v448 = vld [vmem:[%s357 + $0x18] sm:$0xff]
        %v449 = vld [vmem:[%s357 + $0x20] sm:$0xff]
        %v450 = vld [vmem:[%s357 + $0x28] sm:$0xff]
        %v451 = vld [vmem:[%s357 + $0x30] sm:$0xff]
        %v452 = vld [vmem:[%s357 + $0x38] sm:$0xff]
        %v453 = vld [vmem:[%s357 + $0x40] sm:$0xff]
        %v454 = vld [vmem:[%s357 + $0x48] sm:$0xff]
        %v455 = vld [vmem:[%s357 + $0x50] sm:$0xff]
        %v456 = vld [vmem:[%s357 + $0x58] sm:$0xff]
        %v457 = vld [vmem:[%s357 + $0x60] sm:$0xff]
        %v458 = vld [vmem:[%s357 + $0x68] sm:$0xff]
        %v459 = vld [vmem:[%s357 + $0x70] sm:$0xff]
        %v460 = vld [vmem:[%s357 + $0x78] sm:$0xff]
        %v461 = vld [vmem:[%s357 + $0x80] sm:$0xff]
        %v462 = vld [vmem:[%s357 + $0x88] sm:$0xff]
        %v463 = vld [vmem:[%s357 + $0x90] sm:$0xff]
        %v464 = vld [vmem:[%s357 + $0x98] sm:$0xff]
        %v465 = vld [vmem:[%s357 + $0xa0] sm:$0xff]
        %v466 = vld [vmem:[%s357 + $0xa8] sm:$0xff]
        %v467 = vld [vmem:[%s357 + $0xb0] sm:$0xff]
        %v468 = vld [vmem:[%s357 + $0xb8] sm:$0xff]
        %v469 = vld [vmem:[%s357 + $0xc0] sm:$0xff]
        %v470 = vld [vmem:[%s357 + $0xc8] sm:$0xff]
        %v471 = vld [vmem:[%s357 + $0xd0] sm:$0xff]
        %v472 = vld [vmem:[%s357 + $0xd8] sm:$0xff]
        %v473 = vld [vmem:[%s357 + $0xe0] sm:$0xff]
        %v474 = vld [vmem:[%s357 + $0xe8] sm:$0xff]
        %v475 = vld [vmem:[%s357 + $0xf0] sm:$0xff]
        %v476 = vld [vmem:[%s357 + $0xf8] sm:$0xff]
        %477 = vmatprep.subr.mxu0 0.0
        %478 = vmatpush1.msra.mxu0 %v445
        %479 = vmatprep.subr.mxu0 0.0
        %480 = vmatpush1.msra.mxu0 %v446
        %481 = vmatprep.subr.mxu0 0.0
        %482 = vmatpush1.msra.mxu0 %v447
        %483 = vmatprep.subr.mxu0 0.0
        %484 = vmatpush1.msra.mxu0 %v448
        %485 = vmatprep.subr.mxu0 0.0
        %486 = vmatpush1.msra.mxu0 %v449
        %487 = vmatprep.subr.mxu0 0.0
        %488 = vmatpush1.msra.mxu0 %v450
        %489 = vmatprep.subr.mxu0 0.0
        %490 = vmatpush1.msra.mxu0 %v451
        %491 = vmatprep.subr.mxu0 0.0
        %492 = vmatpush1.msra.mxu0 %v452
        %493 = vmatprep.subr.mxu0 0.0
        %494 = vmatpush1.msra.mxu0 %v453
        %495 = vmatprep.subr.mxu0 0.0
        %496 = vmatpush1.msra.mxu0 %v454
        %497 = vmatprep.subr.mxu0 0.0
        %498 = vmatpush1.msra.mxu0 %v455
        %499 = vmatprep.subr.mxu0 0.0
        %500 = vmatpush1.msra.mxu0 %v456
        %501 = vmatprep.subr.mxu0 0.0
        %502 = vmatpush1.msra.mxu0 %v457
        %503 = vmatprep.subr.mxu0 0.0
        %504 = vmatpush1.msra.mxu0 %v458
        %505 = vmatprep.subr.mxu0 0.0
        %506 = vmatpush1.msra.mxu0 %v459
        %507 = vmatprep.subr.mxu0 0.0
        %508 = vmatpush1.msra.mxu0 %v460
        %509 = vmatprep.subr.mxu0 0.0
        %510 = vmatpush1.msra.mxu0 %v461
        %511 = vmatprep.subr.mxu0 0.0
        %512 = vmatpush1.msra.mxu0 %v462
        %513 = vmatprep.subr.mxu0 0.0
        %514 = vmatpush1.msra.mxu0 %v463
        %515 = vmatprep.subr.mxu0 0.0
        %516 = vmatpush1.msra.mxu0 %v464
        %517 = vmatprep.subr.mxu0 0.0
        %518 = vmatpush1.msra.mxu0 %v465
        %519 = vmatprep.subr.mxu0 0.0
        %520 = vmatpush1.msra.mxu0 %v466
        %521 = vmatprep.subr.mxu0 0.0
        %522 = vmatpush1.msra.mxu0 %v467
        %523 = vmatprep.subr.mxu0 0.0
        %524 = vmatpush1.msra.mxu0 %v468
        %525 = vmatprep.subr.mxu0 0.0
        %526 = vmatpush1.msra.mxu0 %v469
        %527 = vmatprep.subr.mxu0 0.0
        %528 = vmatpush1.msra.mxu0 %v470
        %529 = vmatprep.subr.mxu0 0.0
        %530 = vmatpush1.msra.mxu0 %v471
        %531 = vmatprep.subr.mxu0 0.0
        %532 = vmatpush1.msra.mxu0 %v472
        %533 = vmatprep.subr.mxu0 0.0
        %534 = vmatpush1.msra.mxu0 %v473
        %535 = vmatprep.subr.mxu0 0.0
        %536 = vmatpush1.msra.mxu0 %v474
        %537 = vmatprep.subr.mxu0 0.0
        %538 = vmatpush1.msra.mxu0 %v475
        %539 = vmatprep.subr.mxu0 0.0
        %540 = vmatpush1.msra.mxu0 %v476
        %541 = vmatprep.mubr.f32.mxu0 %v444
        %542 = vmatmul.mubr.f32.gmra.mrb[0].mxu0 %v443
        %v543 = vpop.f32.mrb[0].mxu0
        %v544 = vadd.f32 0.0, %v543
        %v545 = vpop.f32.mrb[0].mxu0
        %546 = vdwg.mxu0
        %v547 = vld [vmem:[%s442] sm:$0x1]
        %v548 = vld [vmem:[%s442 + $0x1] sm:$0x1]
        %v549 = vld [vmem:[%s442 + $0x2] sm:$0x1]
        %v550 = vld [vmem:[%s442 + $0x3] sm:$0x1]
        %v551 = vld [vmem:[%s375] sm:$0xff]
        %v552 = vlaneseq
        %v553 = vshrl.u32 %v552, 7
        %v554 = vsub.s32 0, %v553
        %v555 = vrot.slane %v547, %v554
        %v556 = vmul.f32 %v555, %v551
        %v557 = vlaneseq
        %v558 = vshrl.u32 %v557, 7
        %v559 = vsub.s32 0, %v558
        %v560 = vrot.slane %v548, %v559
        %v561 = vmul.f32 %v560, %v544
        %v562 = vadd.f32 %v556, %v561
        %v563 = vld [vmem:[%s384] sm:$0xff]
        %v564 = vadd.f32 %v563, %v562
        %v565 = vmax.f32 %v564, 0.0
        %v566 = vld [vmem:[%s366] sm:$0xff]
        %v567 = vlaneseq
        %v568 = vshrl.u32 %v567, 7
        %v569 = vsub.s32 0, %v568
        %v570 = vrot.slane %v549, %v569
        %v571 = vmul.f32 %v570, %v566
        %v572 = vlaneseq
        %v573 = vshrl.u32 %v572, 7
        %v574 = vsub.s32 0, %v573
        %v575 = vrot.slane %v550, %v574
        %v576 = vmul.f32 %v575, %v565
        %v577 = vadd.f32 %v571, %v576
        %578 = vst [vmem:[%s438] sm:$0xff] %v562
        %579 = vst [vmem:[%s431] sm:$0xff] %v577
        %s580 = sand.u32 %s191, 1
        %s581 = scalar_lea.sflag [#allocation4], %s580
        %s582 = sand.u32 %s191, 1
        %s583 = smul.addr %s582, 8
        %s584 = scalar_lea.vmem [#allocation11], %s583
        %s585 = sand.u32 %s217, 1
        %s586 = scalar_lea.sflag [#allocation13], %s585
        %s587 = sand.u32 %s217, 1
        %s588 = smul.addr %s587, 8
        %s589 = scalar_lea.vmem [#allocation12], %s588
        // Predicated region
        $region65: #{tpu_custom_call.1} parent=43 // pred_check
          %p590 = pneg %p201
        $region66: #{tpu_custom_call.1} parent=43 // pred_check_branch
          %592 = sbr.rel (%p590) target = $region68
        $region67: #{tpu_custom_call.1} parent=43 // pred_region
          %s594 = ssub.s32 128, 128
          %595 = vsyncadd %s581, %s594
          %s596 = smul.addr %s32, 128
          %s597 = scalar_lea.hbm %s6, %s596
          %s599 = sshll.u32 %s584, 4
          %s600 = int_to_ptr.vmem [resolvable:$true] %s599
          %602 = dma.vmem_to_hbm [thread:$0]  %s600, 128, %s597, %s581
        $region68: #{tpu_custom_call.1} parent=43 // pred_fallthru
          _
        // Predicated region
        $region69: #{tpu_custom_call.1} parent=43 // pred_check
          %p603 = pneg %p227
        $region70: #{tpu_custom_call.1} parent=43 // pred_check_branch
          %605 = sbr.rel (%p603) target = $region72
        $region71: #{tpu_custom_call.1} parent=43 // pred_region
          %s607 = ssub.s32 128, 128
          %608 = vsyncadd %s586, %s607
          %s609 = smul.addr %s32, 128
          %s610 = scalar_lea.hbm %s7, %s609
          %s612 = sshll.u32 %s589, 4
          %s613 = int_to_ptr.vmem [resolvable:$true] %s612
          %615 = dma.vmem_to_hbm [thread:$0]  %s613, 128, %s610, %s586
        $region72: #{tpu_custom_call.1} parent=43 // pred_fallthru
          _
      $region44: #{tpu_custom_call.1} parent=5 // pred_fallthru
        _
      %p616 = scmp.le.s32.totalorder 2, %s27
      // Predicated region
      $region73: #{tpu_custom_call.1} parent=5 // pred_check
        %p617 = pneg %p616
      $region74: #{tpu_custom_call.1} parent=5 // pred_check_branch
        %619 = sbr.rel (%p617) target = $region76
      $region75: #{tpu_custom_call.1} parent=5 // pred_region
        %s620 = ssub.s32 %s27, 2
        // Predicated region
        $region77: #{tpu_custom_call.1} parent=75 // pred_check
          %p621 = pneg %p207
        $region78: #{tpu_custom_call.1} parent=75 // pred_check_branch
          %623 = sbr.rel (%p621) target = $region80
        $region79: #{tpu_custom_call.1} parent=75 // pred_region
          %s624 = sand.u32 %s192, 1
          %s625 = scalar_lea.sflag [#allocation4], %s624
          %s626 = sand.u32 %s192, 1
          %s627 = smul.addr %s626, 8
          %s628 = scalar_lea.vmem [#allocation11], %s627
          %629 = dma.done %s625, 128
        $region80: #{tpu_custom_call.1} parent=75 // pred_fallthru
          _
        // Predicated region
        $region81: #{tpu_custom_call.1} parent=75 // pred_check
          %p630 = pneg %p233
        $region82: #{tpu_custom_call.1} parent=75 // pred_check_branch
          %632 = sbr.rel (%p630) target = $region84
        $region83: #{tpu_custom_call.1} parent=75 // pred_region
          %s633 = sand.u32 %s218, 1
          %s634 = scalar_lea.sflag [#allocation13], %s633
          %s635 = sand.u32 %s218, 1
          %s636 = smul.addr %s635, 8
          %s637 = scalar_lea.vmem [#allocation12], %s636
          %638 = dma.done %s634, 128
        $region84: #{tpu_custom_call.1} parent=75 // pred_fallthru
          _
      $region76: #{tpu_custom_call.1} parent=5 // pred_fallthru
        _
    $region6: #{tpu_custom_call.1} parent=1 // loop_footer
      %s31 = sadd.s32 1, %s27
    $region7: #{tpu_custom_call.1} parent=1 // loop_footer_branch
      %26 = sbr.rel target = $region3
    $region8: #{tpu_custom_call.1} parent=1 // loop_exit
      _
    %639 = vsyncpa [#allocation3], 1
    %s640 = scalar_lea.sflag [#allocation3], 1
    %641 = vsyncpa %s640, 1
    %642 = vsyncpa [#allocation6], 1
    %s643 = scalar_lea.sflag [#allocation6], 1
    %644 = vsyncpa %s643, 1
    %645 = vsyncpa [#allocation9], 1
    %s646 = scalar_lea.sflag [#allocation9], 1
    %647 = vsyncpa %s646, 1
    %648 = vsyncpa [#allocation4], 1
    %s649 = scalar_lea.sflag [#allocation4], 1
    %650 = vsyncpa %s649, 1
    %651 = vsyncpa [#allocation13], 1
    %s652 = scalar_lea.sflag [#allocation13], 1
    %653 = vsyncpa %s652, 1

</llo_original>
